<compile_context>
chip_gen: v7x
topology: tpu7x:2x2x1
jax: 0.10.0
libtpu: 0.0.40
codegen_flags: <defaults>
</compile_context>

<pallas_src>
import functools

import jax
import jax.numpy as jnp
from jax.experimental import pallas as pl
from jax.experimental.pallas import tpu as pltpu

_BN_EPS = 1e-5
_LANE = 128  # TPU lane width


def _round_up(n, m):
    return ((n + m - 1) // m) * m


def _merge_weight(w, piece_widths):
    """Reorder a torch Linear weight's input columns from torch's concat order
    [h_{k-1}, ..., h_1, x0] into the kernel's scratch order [x0, h_1, ..., h_{k-1}]
    and transpose to (in_features, out_features).  Runs ONCE at build time."""
    if len(piece_widths) == 1:
        return jnp.transpose(w)
    offs, acc = [], 0
    for wd in list(reversed(piece_widths))[:-1]:
        acc += wd
        offs.append(acc)
    pieces = jnp.split(w, offs, axis=1)                      # torch column order
    merged = jnp.concatenate(list(reversed(pieces)), axis=1)  # scratch column order
    return jnp.transpose(merged)


# ---------------------------------------------------------------------------
# Kernel.
#
# refs layout: x, W_1..W_L (merged, bf16), W_final block (bf16), bn_pack (f32),
#              out block, act scratch (bf16).
# Grid axis j tiles the FINAL linear's output columns; the residual stack runs
# only at j == 0 and its activations persist in `act_ref` across grid steps.
# ---------------------------------------------------------------------------
def _generator_kernel(*refs, d0, outs, tn):
    num_res = len(outs)
    x_ref = refs[0]
    w_refs = refs[1:1 + num_res]
    wf_ref = refs[1 + num_res]
    bn_ref = refs[2 + num_res]
    out_ref = refs[3 + num_res]
    act_ref = refs[4 + num_res]

    j = pl.program_id(0)

    @pl.when(j == 0)
    def _():
        # "torch.cat([h, x], dim=1)" is pure bookkeeping: every piece lives at a
        # fixed column offset of the persistent VMEM scratch.
        act_ref[:, 0:d0] = x_ref[...].astype(act_ref.dtype)
        off = d0
        for k, o in enumerate(outs):
            # Linear (bias dropped: exactly cancelled by the BN mean subtraction).
            h = jnp.dot(act_ref[:, 0:off], w_refs[k][...],
                        preferred_element_type=jnp.float32)

            # BatchNorm1d, training mode: batch mean / biased batch variance,
            # all elementwise math in f32 (no bf16 on the v5e VPU).
            gamma = bn_ref[2 * k:2 * k + 1, 0:o]
            beta = bn_ref[2 * k + 1:2 * k + 2, 0:o]
            mean = jnp.mean(h, axis=0, keepdims=True)
            cent = h - mean
            var = jnp.mean(cent * cent, axis=0, keepdims=True)
            scale = gamma * jax.lax.rsqrt(var + _BN_EPS)   # EUP slot
            shift = beta - mean * scale
            h = jnp.maximum(h * scale + shift, 0.0)        # fused affine + ReLU

            act_ref[:, off:off + o] = h.astype(act_ref.dtype)
            off += o

    # Final Linear on this output-column block.
    col = pl.multiple_of(j * tn, tn)
    bias = bn_ref[2 * num_res:2 * num_res + 1, pl.ds(col, tn)]
    y = jnp.dot(act_ref[...], wf_ref[...], preferred_element_type=jnp.float32)
    out_ref[...] = (y + bias).astype(out_ref.dtype)


# ---------------------------------------------------------------------------
# One-time builder: packs/casts parameters and returns (packed, jitted forward).
# ---------------------------------------------------------------------------
def build_generator_forward(params):
    residuals = params["residuals"]
    if residuals:
        d0 = int(residuals[0]["w"].shape[1])
    else:
        d0 = int(params["final"]["w"].shape[1])
    outs = tuple(int(p["w"].shape[0]) for p in residuals)
    dd = int(params["final"]["w"].shape[0])
    dd_pad = _round_up(dd, _LANE)
    din = d0 + sum(outs)

    # Final-linear output-column tile: 128-multiple dividing dd_pad.
    tn = 512 if dd_pad % 512 == 0 else (256 if dd_pad % 256 == 0 else _LANE)

    # ---- one-time weight prep (reorder + transpose + merge + bf16) ----
    piece_widths = [d0]            # scratch order: [x0, h_1, ..., h_k]
    w_res = []
    for p in residuals:
        w_res.append(_merge_weight(p["w"], piece_widths).astype(jnp.bfloat16))
        piece_widths.append(int(p["w"].shape[0]))
    wf = _merge_weight(params["final"]["w"], piece_widths)      # (din, dd)
    wf = jnp.pad(wf, ((0, 0), (0, dd_pad - dd))).astype(jnp.bfloat16)

    # ---- one-time BN / bias packing into a single (2L+1, P) f32 array ----
    P = max([dd_pad] + list(outs)) if outs else dd_pad
    rows = []
    for p in residuals:
        o = int(p["w"].shape[0])
        rows.append(jnp.pad(p["gamma"].astype(jnp.float32), (0, P - o)))
        rows.append(jnp.pad(p["beta"].astype(jnp.float32), (0, P - o)))
    rows.append(jnp.pad(params["final"]["b"].astype(jnp.float32), (0, P - dd)))
    bn_pack = jnp.stack(rows)

    packed = dict(w_res=tuple(w_res), w_final=wf, bn_pack=bn_pack)

    kernel = functools.partial(_generator_kernel, d0=d0, outs=outs, tn=tn)

    def forward(packed, x):
        B = x.shape[0]
        assert x.shape[1] == d0
        w_res = packed["w_res"]
        wf = packed["w_final"]
        bn = packed["bn_pack"]
        grid = (dd_pad // tn,)

        in_specs = [pl.BlockSpec((B, d0), lambda j: (0, 0))]
        in_specs += [pl.BlockSpec(tuple(w.shape), lambda j: (0, 0)) for w in w_res]
        in_specs += [pl.BlockSpec((din, tn), lambda j: (0, j)),
                     pl.BlockSpec(tuple(bn.shape), lambda j: (0, 0))]
        out_specs = pl.BlockSpec((B, tn), lambda j: (0, j))

        # Cost estimate (advisory).
        flops, cum = 0, d0
        for o in outs:
            flops += 2 * B * cum * o
            cum += o
        flops += 2 * B * din * dd_pad
        bytes_accessed = (B * d0 * 4 + sum(int(w.size) * 2 for w in w_res)
                          + int(wf.size) * 2 + int(bn.size) * 4 + B * dd_pad * 4)

        # VMEM limit from actual per-block bytes (double-buffered), clamped for v7x.
        block_bytes = (B * d0 * 4 + sum(int(w.size) * 2 for w in w_res)
                       + din * tn * 2 + int(bn.size) * 4 + B * tn * 4)
        vmem_limit = int(min(max(2 * block_bytes + B * din * 2 + (4 << 20), 16 << 20),
                             56 << 20))

        out = pl.pallas_call(
            kernel,
            out_shape=jax.ShapeDtypeStruct((B, dd_pad), jnp.float32),
            grid_spec=pltpu.PrefetchScalarGridSpec(
                num_scalar_prefetch=0,
                grid=grid,
                in_specs=in_specs,
                out_specs=out_specs,
                scratch_shapes=[pltpu.VMEM((B, din), jnp.bfloat16)],
            ),
            compiler_params=pltpu.CompilerParams(
                # must stay "arbitrary": the residual stack runs only at j == 0 and
                # its scratch is per-core.
                dimension_semantics=("arbitrary",),
                vmem_limit_bytes=vmem_limit,
            ),
            cost_estimate=pl.CostEstimate(
                flops=int(flops),
                transcendentals=int(sum(outs)),
                bytes_accessed=int(bytes_accessed),
            ),
        )(x.astype(jnp.float32), *w_res, wf, bn)
        return out[:, :dd]

    return packed, jax.jit(forward)


# ---------------------------------------------------------------------------
# Parameter init (PyTorch-style) + pure-JAX reference for correctness.
# ---------------------------------------------------------------------------
def init_generator_params(key, embedding_dim, generator_dim, data_dim):
    params = {"residuals": []}
    dim = embedding_dim
    for o in generator_dim:
        key, kw, kb = jax.random.split(key, 3)
        bound = 1.0 / jnp.sqrt(dim)
        params["residuals"].append(
            dict(
                w=jax.random.uniform(kw, (o, dim), jnp.float32, -bound, bound),
                b=jax.random.uniform(kb, (o,), jnp.float32, -bound, bound),
                gamma=jnp.ones((o,), jnp.float32),
                beta=jnp.zeros((o,), jnp.float32),
            )
        )
        dim += o
    key, kw, kb = jax.random.split(key, 3)
    bound = 1.0 / jnp.sqrt(dim)
    params["final"] = dict(
        w=jax.random.uniform(kw, (data_dim, dim), jnp.float32, -bound, bound),
        b=jax.random.uniform(kb, (data_dim,), jnp.float32, -bound, bound),
    )
    return params


def generator_reference(params, x):
    # Mirrors PyTorch exactly, INCLUDING the residual biases (the kernel drops them
    # because the training-mode BN mean subtraction cancels them algebraically).
    for p in params["residuals"]:
        h = x @ p["w"].T + p["b"]
        mean = jnp.mean(h, axis=0, keepdims=True)
        var = jnp.mean((h - mean) ** 2, axis=0, keepdims=True)
        h = (h - mean) / jnp.sqrt(var + _BN_EPS)
        h = p["gamma"] * h + p["beta"]
        h = jnp.maximum(h, 0.0)
        x = jnp.concatenate([h, x], axis=1)
    return x @ params["final"]["w"].T + params["final"]["b"]


if __name__ == "__main__":
    batch = 8               # multiple of 8 sublanes; whole batch in one grid step (BN)
    embedding_dim = 32
    generator_dim = (32, 32)
    data_dim = 16

    key = jax.random.PRNGKey(0)
    key, kx = jax.random.split(key)
    x = jax.random.normal(kx, (batch, embedding_dim), jnp.float32)
    params = init_generator_params(key, embedding_dim, generator_dim, data_dim)

    # One-time prep (all padding / transposing / packing happens here, not per call).
    packed, forward = build_generator_forward(params)

    out = forward(packed, x)
    jax.block_until_ready(out)

    ref = generator_reference(params, x)
    assert out.shape == (batch, data_dim)
    # bf16 weights/activations on the MXU path -> bf16-level tolerance vs f32 ref.
    assert jnp.allclose(out, ref, atol=2e-2, rtol=2e-2), (
        f"mismatch vs reference: max err {jnp.max(jnp.abs(out - ref))}")

    print("KERNEL_OK")
</pallas_src>

<mosaic_0001>
module attributes {stable_mosaic.version = 11 : i64} {
  func.func @_generator_kernel(%arg0: i32, %arg1: memref<8x32xf32, #tpu.memory_space<vmem>>, %arg2: memref<32x32xbf16, #tpu.memory_space<vmem>>, %arg3: memref<64x32xbf16, #tpu.memory_space<vmem>>, %arg4: memref<96x128xbf16, #tpu.memory_space<vmem>>, %arg5: memref<5x128xf32, #tpu.memory_space<vmem>>, %arg6: memref<8x128xf32, #tpu.memory_space<vmem>>, %arg7: memref<8x96xbf16, #tpu.memory_space<vmem>>) attributes {dimension_semantics = [#tpu.dimension_semantics<arbitrary>], iteration_bounds = array<i64: 1>, scalar_prefetch = 0 : i64, scratch_operands = 1 : i64, tpu.core_type = #tpu.core_type<tc>, window_params = [{pipeline_mode = #tpu.pipeline_mode<synchronous>, transform_indices = @transform_0, window_bounds = array<i64: 8, 32>}, {pipeline_mode = #tpu.pipeline_mode<synchronous>, transform_indices = @transform_1, window_bounds = array<i64: 32, 32>}, {pipeline_mode = #tpu.pipeline_mode<synchronous>, transform_indices = @transform_2, window_bounds = array<i64: 64, 32>}, {transform_indices = @transform_3, window_bounds = array<i64: 96, 128>}, {pipeline_mode = #tpu.pipeline_mode<synchronous>, transform_indices = @transform_4, window_bounds = array<i64: 5, 128>}, {transform_indices = @transform_5, window_bounds = array<i64: 8, 128>}]} {
    %c0_i32 = arith.constant 0 : i32
    %0 = arith.cmpi eq, %arg0, %c0_i32 : i32
    %1 = arith.extui %0 : i1 to i32
    %c0_i32_0 = arith.constant 0 : i32
    %2 = arith.cmpi ne, %1, %c0_i32_0 : i32
    scf.if %2 {
      %c0_6 = arith.constant 0 : index
      %c0_7 = arith.constant 0 : index
      %13 = vector.load %arg1[%c0_6, %c0_7] : memref<8x32xf32, #tpu.memory_space<vmem>>, vector<8x32xf32>
      %14 = arith.truncf %13 : vector<8x32xf32> to vector<8x32xbf16>
      %c0_8 = arith.constant 0 : index
      %c0_9 = arith.constant 0 : index
      %15 = vector.load %arg7[%c0_8, %c0_9] : memref<8x96xbf16, #tpu.memory_space<vmem>>, vector<8x32xbf16>
      tpu.vector_store %arg7[%c0_8, %c0_9], %14 {strides = array<i32>} : memref<8x96xbf16, #tpu.memory_space<vmem>>, vector<8x32xbf16>,
      %c0_10 = arith.constant 0 : index
      %c0_11 = arith.constant 0 : index
      %16 = vector.load %arg7[%c0_10, %c0_11] : memref<8x96xbf16, #tpu.memory_space<vmem>>, vector<8x32xbf16>
      %c0_12 = arith.constant 0 : index
      %c0_13 = arith.constant 0 : index
      %17 = vector.load %arg2[%c0_12, %c0_13] : memref<32x32xbf16, #tpu.memory_space<vmem>>, vector<32x32xbf16>
      %cst_14 = arith.constant dense<0.000000e+00> : vector<8x32xf32>
      %18 = tpu.matmul %16, %17, %cst_14 {dimension_numbers = #tpu.dot_dimension_numbers<[1], [0], [0], [1], [0, 0, 1, 1], [], []>} : vector<8x32xbf16>, vector<32x32xbf16>, vector<8x32xf32> -> vector<8x32xf32>
      %c0_15 = arith.constant 0 : index
      %c0_16 = arith.constant 0 : index
      %19 = vector.load %arg5[%c0_15, %c0_16] : memref<5x128xf32, #tpu.memory_space<vmem>>, vector<1x32xf32>
      %c1 = arith.constant 1 : index
      %c0_17 = arith.constant 0 : index
      %20 = vector.load %arg5[%c1, %c0_17] : memref<5x128xf32, #tpu.memory_space<vmem>>, vector<1x32xf32>
      %cst_18 = arith.constant dense<0.000000e+00> : vector<32xf32>
      %21 = vector.multi_reduction <add>, %18, %cst_18 [0] : vector<8x32xf32> to vector<32xf32>
      %22 = vector.shape_cast %21 : vector<32xf32> to vector<1x32xf32>
      %cst_19 = arith.constant 8.000000e+00 : f32
      %23 = vector.broadcast %cst_19 : f32 to vector<1x32xf32>
      %24 = arith.divf %22, %23 : vector<1x32xf32>
      %25 = vector.broadcast %24 : vector<1x32xf32> to vector<8x32xf32>
      %26 = arith.subf %18, %25 : vector<8x32xf32>
      %27 = arith.mulf %26, %26 : vector<8x32xf32>
      %cst_20 = arith.constant dense<0.000000e+00> : vector<32xf32>
      %28 = vector.multi_reduction <add>, %27, %cst_20 [0] : vector<8x32xf32> to vector<32xf32>
      %29 = vector.shape_cast %28 : vector<32xf32> to vector<1x32xf32>
      %cst_21 = arith.constant 8.000000e+00 : f32
      %30 = vector.broadcast %cst_21 : f32 to vector<1x32xf32>
      %31 = arith.divf %29, %30 : vector<1x32xf32>
      %cst_22 = arith.constant 9.99999974E-6 : f32
      %32 = vector.broadcast %cst_22 : f32 to vector<1x32xf32>
      %33 = arith.addf %31, %32 : vector<1x32xf32>
      %34 = math.rsqrt %33 : vector<1x32xf32>
      %35 = arith.mulf %19, %34 : vector<1x32xf32>
      %36 = arith.mulf %24, %35 : vector<1x32xf32>
      %37 = arith.subf %20, %36 : vector<1x32xf32>
      %38 = vector.broadcast %35 : vector<1x32xf32> to vector<8x32xf32>
      %39 = arith.mulf %18, %38 : vector<8x32xf32>
      %40 = vector.broadcast %37 : vector<1x32xf32> to vector<8x32xf32>
      %41 = arith.addf %39, %40 : vector<8x32xf32>
      %cst_23 = arith.constant 0.000000e+00 : f32
      %42 = vector.broadcast %cst_23 : f32 to vector<8x32xf32>
      %43 = arith.maximumf %41, %42 : vector<8x32xf32>
      %44 = arith.truncf %43 : vector<8x32xf32> to vector<8x32xbf16>
      %c0_24 = arith.constant 0 : index
      %c32 = arith.constant 32 : index
      %45 = vector.load %arg7[%c0_24, %c32] : memref<8x96xbf16, #tpu.memory_space<vmem>>, vector<8x32xbf16>
      tpu.vector_store %arg7[%c0_24, %c32], %44 {strides = array<i32>} : memref<8x96xbf16, #tpu.memory_space<vmem>>, vector<8x32xbf16>,
      %c0_25 = arith.constant 0 : index
      %c0_26 = arith.constant 0 : index
      %46 = vector.load %arg7[%c0_25, %c0_26] : memref<8x96xbf16, #tpu.memory_space<vmem>>, vector<8x64xbf16>
      %c0_27 = arith.constant 0 : index
      %c0_28 = arith.constant 0 : index
      %47 = vector.load %arg3[%c0_27, %c0_28] : memref<64x32xbf16, #tpu.memory_space<vmem>>, vector<64x32xbf16>
      %cst_29 = arith.constant dense<0.000000e+00> : vector<8x32xf32>
      %48 = tpu.matmul %46, %47, %cst_29 {dimension_numbers = #tpu.dot_dimension_numbers<[1], [0], [0], [1], [0, 0, 1, 1], [], []>} : vector<8x64xbf16>, vector<64x32xbf16>, vector<8x32xf32> -> vector<8x32xf32>
      %c2 = arith.constant 2 : index
      %c0_30 = arith.constant 0 : index
      %49 = vector.load %arg5[%c2, %c0_30] : memref<5x128xf32, #tpu.memory_space<vmem>>, vector<1x32xf32>
      %c3 = arith.constant 3 : index
      %c0_31 = arith.constant 0 : index
      %50 = vector.load %arg5[%c3, %c0_31] : memref<5x128xf32, #tpu.memory_space<vmem>>, vector<1x32xf32>
      %cst_32 = arith.constant dense<0.000000e+00> : vector<32xf32>
      %51 = vector.multi_reduction <add>, %48, %cst_32 [0] : vector<8x32xf32> to vector<32xf32>
      %52 = vector.shape_cast %51 : vector<32xf32> to vector<1x32xf32>
      %cst_33 = arith.constant 8.000000e+00 : f32
      %53 = vector.broadcast %cst_33 : f32 to vector<1x32xf32>
      %54 = arith.divf %52, %53 : vector<1x32xf32>
      %55 = vector.broadcast %54 : vector<1x32xf32> to vector<8x32xf32>
      %56 = arith.subf %48, %55 : vector<8x32xf32>
      %57 = arith.mulf %56, %56 : vector<8x32xf32>
      %cst_34 = arith.constant dense<0.000000e+00> : vector<32xf32>
      %58 = vector.multi_reduction <add>, %57, %cst_34 [0] : vector<8x32xf32> to vector<32xf32>
      %59 = vector.shape_cast %58 : vector<32xf32> to vector<1x32xf32>
      %cst_35 = arith.constant 8.000000e+00 : f32
      %60 = vector.broadcast %cst_35 : f32 to vector<1x32xf32>
      %61 = arith.divf %59, %60 : vector<1x32xf32>
      %cst_36 = arith.constant 9.99999974E-6 : f32
      %62 = vector.broadcast %cst_36 : f32 to vector<1x32xf32>
      %63 = arith.addf %61, %62 : vector<1x32xf32>
      %64 = math.rsqrt %63 : vector<1x32xf32>
      %65 = arith.mulf %49, %64 : vector<1x32xf32>
      %66 = arith.mulf %54, %65 : vector<1x32xf32>
      %67 = arith.subf %50, %66 : vector<1x32xf32>
      %68 = vector.broadcast %65 : vector<1x32xf32> to vector<8x32xf32>
      %69 = arith.mulf %48, %68 : vector<8x32xf32>
      %70 = vector.broadcast %67 : vector<1x32xf32> to vector<8x32xf32>
      %71 = arith.addf %69, %70 : vector<8x32xf32>
      %cst_37 = arith.constant 0.000000e+00 : f32
      %72 = vector.broadcast %cst_37 : f32 to vector<8x32xf32>
      %73 = arith.maximumf %71, %72 : vector<8x32xf32>
      %74 = arith.truncf %73 : vector<8x32xf32> to vector<8x32xbf16>
      %c0_38 = arith.constant 0 : index
      %c64 = arith.constant 64 : index
      %75 = vector.load %arg7[%c0_38, %c64] : memref<8x96xbf16, #tpu.memory_space<vmem>>, vector<8x32xbf16>
      tpu.vector_store %arg7[%c0_38, %c64], %74 {strides = array<i32>} : memref<8x96xbf16, #tpu.memory_space<vmem>>, vector<8x32xbf16>,
    } else {
    }
    %c128_i32 = arith.constant 128 : i32
    %3 = arith.muli %arg0, %c128_i32 : i32
    %4 = tpu.assume_multiple %3, 128 : i32
    %c4 = arith.constant 4 : index
    %5 = arith.index_cast %4 : i32 to index
    %6 = vector.load %arg5[%c4, %5] : memref<5x128xf32, #tpu.memory_space<vmem>>, vector<1x128xf32>
    %c0 = arith.constant 0 : index
    %c0_1 = arith.constant 0 : index
    %7 = vector.load %arg7[%c0, %c0_1] : memref<8x96xbf16, #tpu.memory_space<vmem>>, vector<8x96xbf16>
    %c0_2 = arith.constant 0 : index
    %c0_3 = arith.constant 0 : index
    %8 = vector.load %arg4[%c0_2, %c0_3] : memref<96x128xbf16, #tpu.memory_space<vmem>>, vector<96x128xbf16>
    %cst = arith.constant dense<0.000000e+00> : vector<8x128xf32>
    %9 = tpu.matmul %7, %8, %cst {dimension_numbers = #tpu.dot_dimension_numbers<[1], [0], [0], [1], [0, 0, 1, 1], [], []>} : vector<8x96xbf16>, vector<96x128xbf16>, vector<8x128xf32> -> vector<8x128xf32>
    %10 = vector.broadcast %6 : vector<1x128xf32> to vector<8x128xf32>
    %11 = arith.addf %9, %10 : vector<8x128xf32>
    %c0_4 = arith.constant 0 : index
    %c0_5 = arith.constant 0 : index
    %12 = vector.load %arg6[%c0_4, %c0_5] : memref<8x128xf32, #tpu.memory_space<vmem>>, vector<8x128xf32>
    tpu.vector_store %arg6[%c0_4, %c0_5], %11 {strides = array<i32>} : memref<8x128xf32, #tpu.memory_space<vmem>>, vector<8x128xf32>,
    return
  }
  func.func @transform_0(%arg0: i32) -> (i32, i32) {
    %c0_i32 = arith.constant 0 : i32
    %c0_i32_0 = arith.constant 0 : i32
    %c0_i32_1 = arith.constant 0 : i32
    return %c0_i32, %c0_i32_0 : i32, i32
  }
  func.func @transform_1(%arg0: i32) -> (i32, i32) {
    %c0_i32 = arith.constant 0 : i32
    %c0_i32_0 = arith.constant 0 : i32
    %c0_i32_1 = arith.constant 0 : i32
    return %c0_i32, %c0_i32_0 : i32, i32
  }
  func.func @transform_2(%arg0: i32) -> (i32, i32) {
    %c0_i32 = arith.constant 0 : i32
    %c0_i32_0 = arith.constant 0 : i32
    %c0_i32_1 = arith.constant 0 : i32
    return %c0_i32, %c0_i32_0 : i32, i32
  }
  func.func @transform_3(%arg0: i32) -> (i32, i32) {
    %c0_i32 = arith.constant 0 : i32
    %c0_i32_0 = arith.constant 0 : i32
    return %c0_i32, %arg0 : i32, i32
  }
  func.func @transform_4(%arg0: i32) -> (i32, i32) {
    %c0_i32 = arith.constant 0 : i32
    %c0_i32_0 = arith.constant 0 : i32
    %c0_i32_1 = arith.constant 0 : i32
    return %c0_i32, %c0_i32_0 : i32, i32
  }
  func.func @transform_5(%arg0: i32) -> (i32, i32) {
    %c0_i32 = arith.constant 0 : i32
    %c0_i32_0 = arith.constant 0 : i32
    return %c0_i32, %arg0 : i32, i32
  }
}

</mosaic_0001>

<llo_original>
// kernel: forward.1
$region0: #{forward.1}
  #allocation0 [shape = 'u32[]', space=smem, size = 0x4, offset = 0x4, fixed_abs, tag = 'smem constant byte address 0x4 - core index']
  #allocation1 [shape = 'u32[144,128]{1,0:T(1,128)}', space=vmem, size = 0x12000, scoped, tag = 'internal scratch']
  #allocation2 [shape = 'bf16[8,96]{1,0:T(8,128)(2,1)}', space=vmem, size = 0x800, scoped, tag = 'scratch operand']
  %s0 = inlined_call_operand.vmem [shape: f32[8,32], index: 0, kind: input, shape index: {}]
  %s1 = inlined_call_operand.hbm [shape: bf16[32,32], index: 1, kind: input, shape index: {}]
  %s2 = inlined_call_operand.vmem [shape: bf16[64,32], index: 2, kind: input, shape index: {}]
  %s3 = inlined_call_operand.vmem [shape: bf16[96,128], index: 3, kind: input, shape index: {}]
  %s4 = inlined_call_operand.hbm [shape: f32[5,128], index: 4, kind: input, shape index: {}]
  %s5 = inlined_call_operand.hbm [shape: f32[8,128], index: 5, kind: output, shape index: {}]
  %s6 = sld [smem:[#allocation0]]
  $region42: #{forward.1} parent=0
    _
  %s8 = ssub.s32 1, %s6
  %s9 = scalar_select 0, %s8, %s6
  $region1: #{forward.1} parent=0
    #allocation3 [shape = 'u8[8192]{0}', space=vmem, size = 0x2000, scoped, tag = 'input window, operand 1, single buffered']
    #allocation4 [shape = 's32[1]{0}', space=sflag, size = 0x4, scoped, tag = 'scoped memory for forward.1']
    #allocation5 [shape = 's32[1]{0}', space=sflag, size = 0x4, scoped, tag = 'scoped memory for forward.1']
    #allocation6 [shape = 'u8[4096]{0}', space=vmem, size = 0x1000, scoped, tag = 'input window, operand 4, single buffered']
    #allocation7 [shape = 's32[1]{0}', space=sflag, size = 0x4, scoped, tag = 'scoped memory for forward.1']
    #allocation8 [shape = 'u8[4096]{0}', space=vmem, size = 0x1000, scoped, tag = 'output window, operand 0, single buffered']
    %10 = vsyncpa [#allocation4], 0
    %11 = vsyncpa [#allocation7], 0
    %12 = vsyncpa [#allocation5], 0
    // Predicated region
    $region2: #{forward.1} parent=1 // pred_check
      _
    $region3: #{forward.1} parent=1 // pred_check_branch
      %14 = sbr.rel (0) target = $region5
    $region4: #{forward.1} parent=1 // pred_region
      _
    $region5: #{forward.1} parent=1 // pred_fallthru
      _
    // Predicated region
    $region6: #{forward.1} parent=1 // pred_check
      _
    $region7: #{forward.1} parent=1 // pred_check_branch
      %16 = sbr.rel (0) target = $region9
    $region8: #{forward.1} parent=1 // pred_region
      %s18 = ssub.s32 256, 256
      %19 = vsyncadd [#allocation4], %s18
      %s20 = sshll.u32 [#allocation3], 4
      %s21 = int_to_ptr.vmem [resolvable:$true] %s20
      %26 = dma.hbm_to_vmem [thread:$0]  %s1, 256, %s21, [#allocation4], 64, 64, 4
    $region9: #{forward.1} parent=1 // pred_fallthru
      _
    // Predicated region
    $region10: #{forward.1} parent=1 // pred_check
      _
    $region11: #{forward.1} parent=1 // pred_check_branch
      %28 = sbr.rel (0) target = $region13
    $region12: #{forward.1} parent=1 // pred_region
      _
    $region13: #{forward.1} parent=1 // pred_fallthru
      _
    // Predicated region
    $region14: #{forward.1} parent=1 // pred_check
      _
    $region15: #{forward.1} parent=1 // pred_check_branch
      %30 = sbr.rel (0) target = $region17
    $region16: #{forward.1} parent=1 // pred_region
      _
    $region17: #{forward.1} parent=1 // pred_fallthru
      _
    // Predicated region
    $region18: #{forward.1} parent=1 // pred_check
      _
    $region19: #{forward.1} parent=1 // pred_check_branch
      %32 = sbr.rel (0) target = $region21
    $region20: #{forward.1} parent=1 // pred_region
      %s34 = ssub.s32 128, 128
      %35 = vsyncadd [#allocation7], %s34
      %s37 = sshll.u32 [#allocation6], 4
      %s38 = int_to_ptr.vmem [resolvable:$true] %s37
      %40 = dma.hbm_to_vmem [thread:$0]  %s4, 128, %s38, [#allocation7]
    $region21: #{forward.1} parent=1 // pred_fallthru
      _
    // Predicated region
    $region22: #{forward.1} parent=1 // pred_check
      _
    $region23: #{forward.1} parent=1 // pred_check_branch
      %42 = sbr.rel (0) target = $region25
    $region24: #{forward.1} parent=1 // pred_region
      %43 = dma.done [#allocation4], 256
    $region25: #{forward.1} parent=1 // pred_fallthru
      _
    // Predicated region
    $region26: #{forward.1} parent=1 // pred_check
      _
    $region27: #{forward.1} parent=1 // pred_check_branch
      %45 = sbr.rel (0) target = $region29
    $region28: #{forward.1} parent=1 // pred_region
      %46 = dma.done [#allocation7], 128
    $region29: #{forward.1} parent=1 // pred_fallthru
      _
    %p48 = scmp.eq.s32.totalorder 0, 0
    // Predicated region
    $region30: #{forward.1} parent=1 // pred_check
      %p49 = pneg %p48
    $region31: #{forward.1} parent=1 // pred_check_branch
      %51 = sbr.rel (%p49) target = $region33
    $region32: #{forward.1} parent=1 // pred_region
      %v52 = vld [vmem:[%s0] sm:$0xff]
      %v53 = vpack.c.bf16 %v52, %v52
      %vm54 = vcmask 257024
      %55 = vst.msk [vmem:[#allocation2] sm:$0xf] %vm54, %v53
      %v56 = vld [vmem:[#allocation2] sm:$0xf]
      %v57 = vld [vmem:[#allocation3] sm:$0xf]
      %v58 = vld [vmem:[#allocation3 + $0x4] sm:$0xf]
      %v59 = vld [vmem:[#allocation3 + $0x8] sm:$0xf]
      %v60 = vld [vmem:[#allocation3 + $0xc] sm:$0xf]
      %v65 = vunpack.c.l.b16 %v57
      %v66 = vunpack.c.l.b16 %v58
      %v67 = vunpack.c.l.b16 %v59
      %v68 = vunpack.c.l.b16 %v60
      %v69 = vpack.c.b16 %v66, %v65
      %v70 = vpack.c.b16 %v68, %v67
      %vm73 = vcmask 261120
      %v75 = vsel %vm73, %v56, 0
      %77 = vmatprep.subr.bf16.mxu0 0
      %78 = vmatpush1.bf16.msra.mxu0 %v69
      %79 = vmatprep.subr.bf16.mxu0 0
      %80 = vmatpush1.bf16.msra.mxu0 %v70
      %81 = vmatprep.subr.bf16.mxu0 0
      %82 = vmatpush1.bf16.msra.mxu0 0
      %83 = vmatprep.subr.bf16.mxu0 0
      %84 = vmatpush1.bf16.msra.mxu0 0
      %85 = vmatprep.subr.bf16.mxu0 0
      %86 = vmatpush1.bf16.msra.mxu0 0
      %87 = vmatprep.subr.bf16.mxu0 0
      %88 = vmatpush1.bf16.msra.mxu0 0
      %89 = vmatprep.subr.bf16.mxu0 0
      %90 = vmatpush1.bf16.msra.mxu0 0
      %91 = vmatprep.subr.bf16.mxu0 0
      %92 = vmatpush1.bf16.msra.mxu0 0
      %93 = vmatprep.subr.bf16.mxu0 0
      %94 = vmatpush1.bf16.msra.mxu0 0
      %95 = vmatprep.subr.bf16.mxu0 0
      %96 = vmatpush1.bf16.msra.mxu0 0
      %97 = vmatprep.subr.bf16.mxu0 0
      %98 = vmatpush1.bf16.msra.mxu0 0
      %99 = vmatprep.subr.bf16.mxu0 0
      %100 = vmatpush1.bf16.msra.mxu0 0
      %101 = vmatprep.subr.bf16.mxu0 0
      %102 = vmatpush1.bf16.msra.mxu0 0
      %103 = vmatprep.subr.bf16.mxu0 0
      %104 = vmatpush1.bf16.msra.mxu0 0
      %105 = vmatprep.subr.bf16.mxu0 0
      %106 = vmatpush1.bf16.msra.mxu0 0
      %107 = vmatprep.subr.bf16.mxu0 0
      %108 = vmatpush1.bf16.msra.mxu0 0
      %109 = vmatprep.mubr.bf16.mxu0 0
      %110 = vmatmul.mubr.bf16.gmra.mrb[0].mxu0 %v75
      %v111 = vpop.f32.mrb[0].mxu0
      %v112 = vadd.f32 0.0, %v111
      %v113 = vpop.f32.mrb[0].mxu0
      %v114 = vpop.f32.mrb[0].mxu0
      %v115 = vpop.f32.mrb[0].mxu0
      %116 = vdwg.mxu0
      %v117 = vld [vmem:[#allocation6] sm:$0x1]
      %v118 = vld [vmem:[#allocation6 + $0x1] sm:$0x1]
      %v119 = vsel %vm73, %v112, 0.0
      %v120 = vrot.slane %v119, 4
      %v121 = vadd.f32 %v119, %v120
      %v122 = vrot.slane %v121, 2
      %v123 = vadd.f32 %v121, %v122
      %v124 = vrot.slane %v123, 1
      %v125 = vadd.f32 %v123, %v124
      %v126 = vrcp.pop 8.0
      %v127 = vmul.f32 %v125, %v126
      %v128 = vsub.f32 %v112, %v127
      %v129 = vmul.f32 %v128, %v128
      %v130 = vsel %vm73, %v129, 0.0
      %v131 = vrot.slane %v130, 4
      %v132 = vadd.f32 %v130, %v131
      %v133 = vrot.slane %v132, 2
      %v134 = vadd.f32 %v132, %v133
      %v135 = vrot.slane %v134, 1
      %v136 = vadd.f32 %v134, %v135
      %v137 = vmul.f32 %v136, %v126
      %v138 = vadd.f32 %v137, 1e-05
      %v139 = vrsqrt.pop %v138
      %v140 = vmul.f32 %v117, %v139
      %v141 = vmul.f32 %v127, %v140
      %v142 = vsub.f32 %v118, %v141
      %v143 = vlaneseq
      %v144 = vshrl.u32 %v143, 7
      %v145 = vsub.s32 0, %v144
      %v146 = vrot.slane %v140, %v145
      %v147 = vmul.f32 %v112, %v146
      %v148 = vlaneseq
      %v149 = vshrl.u32 %v148, 7
      %v150 = vsub.s32 0, %v149
      %v151 = vrot.slane %v142, %v150
      %v152 = vadd.f32 %v147, %v151
      %v153 = vmax.f32 %v152, 0.0
      %v154 = vpack.c.bf16 %v153, %v153
      %v156 = vunpack.c.l.b16 %v154
      %v157 = vpack.c.b16 %v156, %v156
      %158 = vrot.lane.b32.xlu0 %v157, 32
      %v159 = vpop.permute.xlu0 %158
      %vm161 = vcmask 519424
      %162 = vst.msk [vmem:[#allocation2] sm:$0xf] %vm161, %v159
      %v163 = vld [vmem:[#allocation2] sm:$0xf]
      %v164 = vld [vmem:[%s2] sm:$0xf]
      %v165 = vld [vmem:[%s2 + $0x4] sm:$0xf]
      %v166 = vld [vmem:[%s2 + $0x8] sm:$0xf]
      %v167 = vld [vmem:[%s2 + $0xc] sm:$0xf]
      %v168 = vld [vmem:[%s2 + $0x10] sm:$0xf]
      %v169 = vld [vmem:[%s2 + $0x14] sm:$0xf]
      %v170 = vld [vmem:[%s2 + $0x18] sm:$0xf]
      %v171 = vld [vmem:[%s2 + $0x1c] sm:$0xf]
      %v180 = vunpack.c.l.b16 %v164
      %v181 = vunpack.c.l.b16 %v165
      %v182 = vunpack.c.l.b16 %v166
      %v183 = vunpack.c.l.b16 %v167
      %v184 = vunpack.c.l.b16 %v168
      %v185 = vunpack.c.l.b16 %v169
      %v186 = vunpack.c.l.b16 %v170
      %v187 = vunpack.c.l.b16 %v171
      %v188 = vpack.c.b16 %v181, %v180
      %v189 = vpack.c.b16 %v183, %v182
      %v190 = vpack.c.b16 %v185, %v184
      %v191 = vpack.c.b16 %v187, %v186
      %vm196 = vcmask 523264
      %v198 = vsel %vm196, %v163, 0
      %200 = vmatprep.subr.bf16.mxu0 0
      %201 = vmatpush1.bf16.msra.mxu0 %v188
      %202 = vmatprep.subr.bf16.mxu0 0
      %203 = vmatpush1.bf16.msra.mxu0 %v189
      %204 = vmatprep.subr.bf16.mxu0 0
      %205 = vmatpush1.bf16.msra.mxu0 %v190
      %206 = vmatprep.subr.bf16.mxu0 0
      %207 = vmatpush1.bf16.msra.mxu0 %v191
      %208 = vmatprep.subr.bf16.mxu0 0
      %209 = vmatpush1.bf16.msra.mxu0 0
      %210 = vmatprep.subr.bf16.mxu0 0
      %211 = vmatpush1.bf16.msra.mxu0 0
      %212 = vmatprep.subr.bf16.mxu0 0
      %213 = vmatpush1.bf16.msra.mxu0 0
      %214 = vmatprep.subr.bf16.mxu0 0
      %215 = vmatpush1.bf16.msra.mxu0 0
      %216 = vmatprep.subr.bf16.mxu0 0
      %217 = vmatpush1.bf16.msra.mxu0 0
      %218 = vmatprep.subr.bf16.mxu0 0
      %219 = vmatpush1.bf16.msra.mxu0 0
      %220 = vmatprep.subr.bf16.mxu0 0
      %221 = vmatpush1.bf16.msra.mxu0 0
      %222 = vmatprep.subr.bf16.mxu0 0
      %223 = vmatpush1.bf16.msra.mxu0 0
      %224 = vmatprep.subr.bf16.mxu0 0
      %225 = vmatpush1.bf16.msra.mxu0 0
      %226 = vmatprep.subr.bf16.mxu0 0
      %227 = vmatpush1.bf16.msra.mxu0 0
      %228 = vmatprep.subr.bf16.mxu0 0
      %229 = vmatpush1.bf16.msra.mxu0 0
      %230 = vmatprep.subr.bf16.mxu0 0
      %231 = vmatpush1.bf16.msra.mxu0 0
      %232 = vmatprep.mubr.bf16.mxu0 0
      %233 = vmatmul.mubr.bf16.gmra.mrb[0].mxu0 %v198
      %v234 = vpop.f32.mrb[0].mxu0
      %v235 = vadd.f32 0.0, %v234
      %v236 = vpop.f32.mrb[0].mxu0
      %v237 = vpop.f32.mrb[0].mxu0
      %v238 = vpop.f32.mrb[0].mxu0
      %239 = vdwg.mxu0
      %v240 = vld [vmem:[#allocation6 + $0x2] sm:$0x1]
      %v241 = vld [vmem:[#allocation6 + $0x3] sm:$0x1]
      %v242 = vsel %vm73, %v235, 0.0
      %v243 = vrot.slane %v242, 4
      %v244 = vadd.f32 %v242, %v243
      %v245 = vrot.slane %v244, 2
      %v246 = vadd.f32 %v244, %v245
      %v247 = vrot.slane %v246, 1
      %v248 = vadd.f32 %v246, %v247
      %v249 = vmul.f32 %v248, %v126
      %v250 = vsub.f32 %v235, %v249
      %v251 = vmul.f32 %v250, %v250
      %v252 = vsel %vm73, %v251, 0.0
      %v253 = vrot.slane %v252, 4
      %v254 = vadd.f32 %v252, %v253
      %v255 = vrot.slane %v254, 2
      %v256 = vadd.f32 %v254, %v255
      %v257 = vrot.slane %v256, 1
      %v258 = vadd.f32 %v256, %v257
      %v259 = vmul.f32 %v258, %v126
      %v260 = vadd.f32 %v259, 1e-05
      %v261 = vrsqrt.pop %v260
      %v262 = vmul.f32 %v240, %v261
      %v263 = vmul.f32 %v249, %v262
      %v264 = vsub.f32 %v241, %v263
      %v265 = vlaneseq
      %v266 = vshrl.u32 %v265, 7
      %v267 = vsub.s32 0, %v266
      %v268 = vrot.slane %v262, %v267
      %v269 = vmul.f32 %v235, %v268
      %v270 = vlaneseq
      %v271 = vshrl.u32 %v270, 7
      %v272 = vsub.s32 0, %v271
      %v273 = vrot.slane %v264, %v272
      %v274 = vadd.f32 %v269, %v273
      %v275 = vmax.f32 %v274, 0.0
      %v276 = vpack.c.bf16 %v275, %v275
      %v278 = vunpack.c.l.b16 %v276
      %v279 = vpack.c.b16 %v278, %v278
      %280 = vrot.lane.b32.xlu0 %v279, 64
      %v281 = vpop.permute.xlu0 %280
      %vm283 = vcmask 781824
      %284 = vst.msk [vmem:[#allocation2] sm:$0xf] %vm283, %v281
    $region33: #{forward.1} parent=1 // pred_fallthru
      _
    %s285 = smul.u32 0, 128
    %s286 = sshra.s32 %s285, 7
    %s287 = sand.u32 %s285, 127
    %s288 = scalar_lea.vmem [#allocation6], %s286
    %v289 = vld [vmem:[%s288 + $0x4] sm:$0x1]
    %v290 = vld [vmem:[#allocation2] sm:$0xf]
    %v291 = vld [vmem:[%s3] sm:$0xf]
    %v292 = vld [vmem:[%s3 + $0x4] sm:$0xf]
    %v293 = vld [vmem:[%s3 + $0x8] sm:$0xf]
    %v294 = vld [vmem:[%s3 + $0xc] sm:$0xf]
    %v295 = vld [vmem:[%s3 + $0x10] sm:$0xf]
    %v296 = vld [vmem:[%s3 + $0x14] sm:$0xf]
    %v297 = vld [vmem:[%s3 + $0x18] sm:$0xf]
    %v298 = vld [vmem:[%s3 + $0x1c] sm:$0xf]
    %v299 = vld [vmem:[%s3 + $0x20] sm:$0xf]
    %v300 = vld [vmem:[%s3 + $0x24] sm:$0xf]
    %v301 = vld [vmem:[%s3 + $0x28] sm:$0xf]
    %v302 = vld [vmem:[%s3 + $0x2c] sm:$0xf]
    %v303 = vlaneseq
    %v304 = vshrl.u32 %v303, 7
    %v305 = vsub.s32 0, %v304
    %v306 = vrot.slane %v289, %v305
    %v319 = vunpack.c.l.b16 %v291
    %v320 = vunpack.c.l.b16 %v292
    %v321 = vunpack.c.l.b16 %v293
    %v322 = vunpack.c.l.b16 %v294
    %v323 = vunpack.c.l.b16 %v295
    %v324 = vunpack.c.l.b16 %v296
    %v325 = vunpack.c.l.b16 %v297
    %v326 = vunpack.c.l.b16 %v298
    %v327 = vunpack.c.l.b16 %v299
    %v328 = vunpack.c.l.b16 %v300
    %v329 = vunpack.c.l.b16 %v301
    %v330 = vunpack.c.l.b16 %v302
    %v331 = vpack.c.b16 %v320, %v319
    %v332 = vpack.c.b16 %v322, %v321
    %v333 = vpack.c.b16 %v324, %v323
    %v334 = vpack.c.b16 %v326, %v325
    %v335 = vpack.c.b16 %v328, %v327
    %v336 = vpack.c.b16 %v330, %v329
    %vm343 = vcmask 785408
    %v345 = vsel %vm343, %v290, 0
    %347 = vmatprep.subr.bf16.mxu0 0
    %348 = vmatpush1.bf16.msra.mxu0 %v331
    %349 = vmatprep.subr.bf16.mxu0 0
    %350 = vmatpush1.bf16.msra.mxu0 %v332
    %351 = vmatprep.subr.bf16.mxu0 0
    %352 = vmatpush1.bf16.msra.mxu0 %v333
    %353 = vmatprep.subr.bf16.mxu0 0
    %354 = vmatpush1.bf16.msra.mxu0 %v334
    %355 = vmatprep.subr.bf16.mxu0 0
    %356 = vmatpush1.bf16.msra.mxu0 %v335
    %357 = vmatprep.subr.bf16.mxu0 0
    %358 = vmatpush1.bf16.msra.mxu0 %v336
    %359 = vmatprep.subr.bf16.mxu0 0
    %360 = vmatpush1.bf16.msra.mxu0 0
    %361 = vmatprep.subr.bf16.mxu0 0
    %362 = vmatpush1.bf16.msra.mxu0 0
    %363 = vmatprep.subr.bf16.mxu0 0
    %364 = vmatpush1.bf16.msra.mxu0 0
    %365 = vmatprep.subr.bf16.mxu0 0
    %366 = vmatpush1.bf16.msra.mxu0 0
    %367 = vmatprep.subr.bf16.mxu0 0
    %368 = vmatpush1.bf16.msra.mxu0 0
    %369 = vmatprep.subr.bf16.mxu0 0
    %370 = vmatpush1.bf16.msra.mxu0 0
    %371 = vmatprep.subr.bf16.mxu0 0
    %372 = vmatpush1.bf16.msra.mxu0 0
    %373 = vmatprep.subr.bf16.mxu0 0
    %374 = vmatpush1.bf16.msra.mxu0 0
    %375 = vmatprep.subr.bf16.mxu0 0
    %376 = vmatpush1.bf16.msra.mxu0 0
    %377 = vmatprep.subr.bf16.mxu0 0
    %378 = vmatpush1.bf16.msra.mxu0 0
    %379 = vmatprep.mubr.bf16.mxu0 0
    %380 = vmatmul.mubr.bf16.gmra.mrb[0].mxu0 %v345
    %v381 = vpop.f32.mrb[0].mxu0
    %v382 = vadd.f32 %v306, %v381
    %v383 = vpop.f32.mrb[0].mxu0
    %v384 = vpop.f32.mrb[0].mxu0
    %v385 = vpop.f32.mrb[0].mxu0
    %386 = vdwg.mxu0
    %387 = vst [vmem:[#allocation8] sm:$0xff] %v382
    // Predicated region
    $region34: #{forward.1} parent=1 // pred_check
      _
    $region35: #{forward.1} parent=1 // pred_check_branch
      %389 = sbr.rel (0) target = $region37
    $region36: #{forward.1} parent=1 // pred_region
      %s391 = ssub.s32 128, 128
      %392 = vsyncadd [#allocation5], %s391
      %s394 = sshll.u32 [#allocation8], 4
      %s395 = int_to_ptr.vmem [resolvable:$true] %s394
      %397 = dma.vmem_to_hbm [thread:$0]  %s395, 128, %s5, [#allocation5]
    $region37: #{forward.1} parent=1 // pred_fallthru
      _
    // Predicated region
    $region38: #{forward.1} parent=1 // pred_check
      _
    $region39: #{forward.1} parent=1 // pred_check_branch
      %399 = sbr.rel (0) target = $region41
    $region40: #{forward.1} parent=1 // pred_region
      %400 = dma.done [#allocation5], 128
    $region41: #{forward.1} parent=1 // pred_fallthru
      _
    %401 = vsyncpa [#allocation4], 1
    %402 = vsyncpa [#allocation7], 1
    %403 = vsyncpa [#allocation5], 1

</llo_original>
